<compile_context>
chip_gen: v5e
topology: v5e:2x2
jax: 0.10.0
libtpu: 0.0.40
codegen_flags: <defaults>
</compile_context>

<pallas_src>
import jax
import jax.numpy as jnp
from jax.experimental import pallas as pl
from jax.experimental.pallas import tpu as pltpu


def _round_up(a, m):
    return ((a + m - 1) // m) * m


# ----------------------------- Pallas kernel -------------------------------
def make_cnn_kernel(cfgs, pad_idx):
    """cfgs: per-layer dicts with static shape/layout info; pad_idx maps layer
    index -> position of its padded-activation scratch buffer."""

    def kernel(x_ref, w_ref, b_ref, out_ref, *pad_refs):
        # One batch element per grid step (block (1, L, C)); everything below
        # is a value/vreg computation except the padded-activation scratch.
        x = x_ref[0].astype(jnp.float32)                    # (L0, C0)

        for i, cfg in enumerate(cfgs):
            k, p = cfg["k"], cfg["p"]
            c_in, c_out_eff = cfg["c_in"], cfg["c_out_eff"]
            l_in, l_out = cfg["l_in"], cfg["l_out"]
            r0, cs = cfg["row_off"], cfg["tap_stride"]

            if p > 0:
                # Zero the halo rows + store the body once into VMEM scratch
                # (replaces the per-layer jnp.concatenate zero-pad).
                pr = pad_refs[pad_idx[i]]
                pr[0:p, :] = jnp.zeros((p, c_in), jnp.float32)
                pr[p + l_in:p + l_in + p, :] = jnp.zeros((p, c_in), jnp.float32)
                pr[p:p + l_in, :] = x

            # k accumulating MXU pushes (bf16 operands, f32 accumulation).
            acc = None
            for dk in range(k):
                if p > 0:
                    tap_f32 = pad_refs[pad_idx[i]][dk:dk + l_out, :]
                else:
                    tap_f32 = x[dk:dk + l_out, :]
                tap = tap_f32.astype(jnp.bfloat16)           # (l_out, c_in)
                wt = w_ref[r0 + dk * cs:r0 + dk * cs + c_in, 0:c_out_eff]
                d = jnp.dot(tap, wt, preferred_element_type=jnp.float32)
                acc = d if acc is None else acc + d

            y = acc + b_ref[i:i + 1, 0:c_out_eff]            # f32 bias add (VPU)
            if cfg["relu"]:
                y = jnp.maximum(y, 0.0)
            x = y                                            # next layer input

        # Last layer's channels were padded to a multiple of 128 -> this store
        # is a full-lane, unmasked vst (lane-dense out_spec).
        out_ref[0] = x.astype(out_ref.dtype)

    return kernel


# ------------------------------- wrapper ------------------------------------
def cnn_forward(data, params, kernels, paddings, activations):
    """data: (B, L, C_in) f32 -> (B, L_out, C_last) f32.

    Matches CNN.forward: permute(0,2,1) -> Conv1d/ReLU stack -> permute(0,2,1).
    params[i] = (w (C_out, C_in, k), bias (C_out,)) in PyTorch Conv1d layout.
    """
    B, L, C = data.shape
    n_layers = len(params)

    # --- static per-layer configuration -------------------------------------
    cfgs = []
    l_cur, c_cur = L, C
    for (w, _), k, p, act in zip(params, kernels, paddings, activations):
        c_out = int(w.shape[0])
        l_out = l_cur + 2 * p - k + 1
        cfgs.append(dict(k=k, p=p, relu=(act == "relu"), c_in=c_cur,
                         c_out=c_out, l_in=l_cur, l_out=l_out))
        c_cur, l_cur = c_out, l_out
    c_last, l_last = c_cur, l_cur
    c_last_pad = _round_up(c_last, 128)          # lane-dense final store
    for i, cfg in enumerate(cfgs):
        cfg["c_out_eff"] = c_last_pad if i == n_layers - 1 else cfg["c_out"]

    # --- pack all weights / biases into single VMEM inputs ------------------
    lane_w = _round_up(max(cfg["c_out_eff"] for cfg in cfgs), 128)
    row_off = 0
    for cfg in cfgs:
        cfg["tap_stride"] = _round_up(cfg["c_in"], 8)   # sublane-aligned tap rows
        cfg["row_off"] = row_off
        row_off += cfg["k"] * cfg["tap_stride"]
    total_rows = _round_up(row_off, 8)

    w_pack = jnp.zeros((total_rows, lane_w), jnp.float32)
    b_pack = jnp.zeros((n_layers, lane_w), jnp.float32)
    for i, ((w, bias), cfg) in enumerate(zip(params, cfgs)):
        # W_dk[ci, co] = w[co, ci, dk]  (PyTorch Conv1d cross-correlation)
        wt = jnp.transpose(w, (2, 1, 0))                 # (k, C_in, C_out)
        for dk in range(cfg["k"]):
            r = cfg["row_off"] + dk * cfg["tap_stride"]
            w_pack = w_pack.at[r:r + cfg["c_in"], :cfg["c_out"]].set(wt[dk])
        b_pack = b_pack.at[i, :cfg["c_out"]].set(bias)
    w_pack = w_pack.astype(jnp.bfloat16)   # bf16 MXU operands, f32 accumulation

    # --- per-layer padded-activation scratch (only when padding > 0) --------
    scratch_shapes = []
    pad_idx = {}
    for i, cfg in enumerate(cfgs):
        if cfg["p"] > 0:
            pad_idx[i] = len(scratch_shapes)
            scratch_shapes.append(
                pltpu.VMEM((cfg["l_in"] + 2 * cfg["p"], cfg["c_in"]), jnp.float32))

    # --- batch-parallel grid -------------------------------------------------
    out = pl.pallas_call(
        make_cnn_kernel(cfgs, pad_idx),
        out_shape=jax.ShapeDtypeStruct((B, l_last, c_last_pad), jnp.float32),
        grid_spec=pltpu.PrefetchScalarGridSpec(
            num_scalar_prefetch=0,
            grid=(B,),
            in_specs=[
                pl.BlockSpec((1, L, C), lambda b: (b, 0, 0)),          # data
                pl.BlockSpec(w_pack.shape, lambda b: (0, 0)),          # weights
                pl.BlockSpec(b_pack.shape, lambda b: (0, 0)),          # biases
            ],
            out_specs=pl.BlockSpec((1, l_last, c_last_pad), lambda b: (b, 0, 0)),
            scratch_shapes=scratch_shapes,
        ),
        compiler_params=pltpu.CompilerParams(
            dimension_semantics=("parallel",)),
    )(data, w_pack, b_pack)

    # Undo the lane padding outside the kernel (cheap XLA slice).
    return out[:, :, :c_last]


# ---------------------------- pure-JAX reference ----------------------------
def cnn_ref(data, params, kernels, paddings, activations):
    x = jnp.transpose(data, (0, 2, 1))  # (B, C, L), like PyTorch after permute
    for (w, bias), k, p, act in zip(params, kernels, paddings, activations):
        x = jax.lax.conv_general_dilated(
            x, w, window_strides=(1,), padding=[(p, p)],
            dimension_numbers=("NCH", "OIH", "NCH"),
            precision=jax.lax.Precision.HIGHEST)
        x = x + bias[None, :, None]
        if act == "relu":
            x = jnp.maximum(x, 0.0)
    return jnp.transpose(x, (0, 2, 1))  # back to (B, L, C_out)


# ------------------------------ param init ----------------------------------
def init_cnn_params(key, units, kernels):
    # PyTorch nn.Conv1d default init: U(-1/sqrt(fan_in), 1/sqrt(fan_in)), fan_in = C_in*k.
    params = []
    for dim_in, dim_out, k in zip(units[:-1], units[1:], kernels):
        key, kw, kb = jax.random.split(key, 3)
        bound = 1.0 / float(dim_in * k) ** 0.5
        w = jax.random.uniform(kw, (dim_out, dim_in, k), jnp.float32, -bound, bound)
        b = jax.random.uniform(kb, (dim_out,), jnp.float32, -bound, bound)
        params.append((w, b))
    return params


if __name__ == "__main__":
    # Small config mirroring the module's args:
    gaze_encoder_units = [8, 32, 64]
    gaze_encoder_kernels = [3, 3, 3]        # same length as units (trailing entry unused, as in the module)
    gaze_encoder_paddings = [1, 1, 1]
    gaze_encoder_activations = ['relu', 'relu']

    n_layers = len(gaze_encoder_units) - 1
    kernels = gaze_encoder_kernels[:n_layers]
    paddings = gaze_encoder_paddings[:n_layers]
    activations = gaze_encoder_activations

    B, L = 2, 16  # batch, sequence length
    key = jax.random.PRNGKey(0)
    key, kd = jax.random.split(key)
    data = jax.random.normal(kd, (B, L, gaze_encoder_units[0]), jnp.float32)
    params = init_cnn_params(key, gaze_encoder_units, kernels)

    out = cnn_forward(data, params, kernels, paddings, activations)
    out = jax.block_until_ready(out)

    ref = cnn_ref(data, params, kernels, paddings, activations)
    assert out.shape == ref.shape == (B, L, gaze_encoder_units[-1]), out.shape
    # Tolerance is intentionally looser than the f32 HIGHEST reference because
    # the kernel uses bf16 MXU operands with f32 accumulation (per perf review).
    assert jnp.allclose(out, ref, atol=2e-2, rtol=2e-2), float(jnp.max(jnp.abs(out - ref)))

    print("KERNEL_OK")
</pallas_src>

<mosaic_0001>
module attributes {stable_mosaic.version = 11 : i64} {
  func.func @kernel(%arg0: i32, %arg1: memref<1x16x8xf32, #tpu.memory_space<vmem>>, %arg2: memref<120x128xbf16, #tpu.memory_space<vmem>>, %arg3: memref<2x128xf32, #tpu.memory_space<vmem>>, %arg4: memref<1x16x128xf32, #tpu.memory_space<vmem>>, %arg5: memref<18x8xf32, #tpu.memory_space<vmem>>, %arg6: memref<18x32xf32, #tpu.memory_space<vmem>>) attributes {dimension_semantics = [#tpu.dimension_semantics<parallel>], iteration_bounds = array<i64: 2>, scalar_prefetch = 0 : i64, scratch_operands = 2 : i64, tpu.core_type = #tpu.core_type<tc>, window_params = [{transform_indices = @transform_0, window_bounds = array<i64: 1, 16, 8>}, {pipeline_mode = #tpu.pipeline_mode<synchronous>, transform_indices = @transform_1, window_bounds = array<i64: 120, 128>}, {pipeline_mode = #tpu.pipeline_mode<synchronous>, transform_indices = @transform_2, window_bounds = array<i64: 2, 128>}, {transform_indices = @transform_3, window_bounds = array<i64: 1, 16, 128>}]} {
    %c0 = arith.constant 0 : index
    %c0_0 = arith.constant 0 : index
    %c0_1 = arith.constant 0 : index
    %0 = vector.load %arg1[%c0, %c0_0, %c0_1] : memref<1x16x8xf32, #tpu.memory_space<vmem>>, vector<1x16x8xf32>
    %1 = vector.shape_cast %0 : vector<1x16x8xf32> to vector<16x8xf32>
    %cst = arith.constant 0.000000e+00 : f32
    %2 = vector.broadcast %cst : f32 to vector<1x8xf32>
    %c0_2 = arith.constant 0 : index
    %c0_3 = arith.constant 0 : index
    %3 = vector.load %arg5[%c0_2, %c0_3] : memref<18x8xf32, #tpu.memory_space<vmem>>, vector<1x8xf32>
    tpu.vector_store %arg5[%c0_2, %c0_3], %2 {strides = array<i32>} : memref<18x8xf32, #tpu.memory_space<vmem>>, vector<1x8xf32>,
    %cst_4 = arith.constant 0.000000e+00 : f32
    %4 = vector.broadcast %cst_4 : f32 to vector<1x8xf32>
    %c17 = arith.constant 17 : index
    %c0_5 = arith.constant 0 : index
    %5 = vector.load %arg5[%c17, %c0_5] : memref<18x8xf32, #tpu.memory_space<vmem>>, vector<1x8xf32>
    tpu.vector_store %arg5[%c17, %c0_5], %4 {strides = array<i32>} : memref<18x8xf32, #tpu.memory_space<vmem>>, vector<1x8xf32>,
    %c1 = arith.constant 1 : index
    %c0_6 = arith.constant 0 : index
    %6 = vector.load %arg5[%c1, %c0_6] : memref<18x8xf32, #tpu.memory_space<vmem>>, vector<16x8xf32>
    tpu.vector_store %arg5[%c1, %c0_6], %1 {strides = array<i32>} : memref<18x8xf32, #tpu.memory_space<vmem>>, vector<16x8xf32>,
    %c0_7 = arith.constant 0 : index
    %c0_8 = arith.constant 0 : index
    %7 = vector.load %arg5[%c0_7, %c0_8] : memref<18x8xf32, #tpu.memory_space<vmem>>, vector<16x8xf32>
    %8 = arith.truncf %7 : vector<16x8xf32> to vector<16x8xbf16>
    %c0_9 = arith.constant 0 : index
    %c0_10 = arith.constant 0 : index
    %9 = vector.load %arg2[%c0_9, %c0_10] : memref<120x128xbf16, #tpu.memory_space<vmem>>, vector<8x32xbf16>
    %cst_11 = arith.constant dense<0.000000e+00> : vector<16x32xf32>
    %10 = tpu.matmul %8, %9, %cst_11 {dimension_numbers = #tpu.dot_dimension_numbers<[1], [0], [0], [1], [0, 0, 1, 1], [], []>} : vector<16x8xbf16>, vector<8x32xbf16>, vector<16x32xf32> -> vector<16x32xf32>
    %c1_12 = arith.constant 1 : index
    %c0_13 = arith.constant 0 : index
    %11 = vector.load %arg5[%c1_12, %c0_13] : memref<18x8xf32, #tpu.memory_space<vmem>>, vector<16x8xf32>
    %12 = arith.truncf %11 : vector<16x8xf32> to vector<16x8xbf16>
    %c8 = arith.constant 8 : index
    %c0_14 = arith.constant 0 : index
    %13 = vector.load %arg2[%c8, %c0_14] : memref<120x128xbf16, #tpu.memory_space<vmem>>, vector<8x32xbf16>
    %cst_15 = arith.constant dense<0.000000e+00> : vector<16x32xf32>
    %14 = tpu.matmul %12, %13, %cst_15 {dimension_numbers = #tpu.dot_dimension_numbers<[1], [0], [0], [1], [0, 0, 1, 1], [], []>} : vector<16x8xbf16>, vector<8x32xbf16>, vector<16x32xf32> -> vector<16x32xf32>
    %15 = arith.addf %10, %14 : vector<16x32xf32>
    %c2 = arith.constant 2 : index
    %c0_16 = arith.constant 0 : index
    %16 = vector.load %arg5[%c2, %c0_16] : memref<18x8xf32, #tpu.memory_space<vmem>>, vector<16x8xf32>
    %17 = arith.truncf %16 : vector<16x8xf32> to vector<16x8xbf16>
    %c16 = arith.constant 16 : index
    %c0_17 = arith.constant 0 : index
    %18 = vector.load %arg2[%c16, %c0_17] : memref<120x128xbf16, #tpu.memory_space<vmem>>, vector<8x32xbf16>
    %cst_18 = arith.constant dense<0.000000e+00> : vector<16x32xf32>
    %19 = tpu.matmul %17, %18, %cst_18 {dimension_numbers = #tpu.dot_dimension_numbers<[1], [0], [0], [1], [0, 0, 1, 1], [], []>} : vector<16x8xbf16>, vector<8x32xbf16>, vector<16x32xf32> -> vector<16x32xf32>
    %20 = arith.addf %15, %19 : vector<16x32xf32>
    %c0_19 = arith.constant 0 : index
    %c0_20 = arith.constant 0 : index
    %21 = vector.load %arg3[%c0_19, %c0_20] : memref<2x128xf32, #tpu.memory_space<vmem>>, vector<1x32xf32>
    %22 = vector.broadcast %21 : vector<1x32xf32> to vector<16x32xf32>
    %23 = arith.addf %20, %22 : vector<16x32xf32>
    %cst_21 = arith.constant 0.000000e+00 : f32
    %24 = vector.broadcast %cst_21 : f32 to vector<16x32xf32>
    %25 = arith.maximumf %23, %24 : vector<16x32xf32>
    %cst_22 = arith.constant 0.000000e+00 : f32
    %26 = vector.broadcast %cst_22 : f32 to vector<1x32xf32>
    %c0_23 = arith.constant 0 : index
    %c0_24 = arith.constant 0 : index
    %27 = vector.load %arg6[%c0_23, %c0_24] : memref<18x32xf32, #tpu.memory_space<vmem>>, vector<1x32xf32>
    tpu.vector_store %arg6[%c0_23, %c0_24], %26 {strides = array<i32>} : memref<18x32xf32, #tpu.memory_space<vmem>>, vector<1x32xf32>,
    %cst_25 = arith.constant 0.000000e+00 : f32
    %28 = vector.broadcast %cst_25 : f32 to vector<1x32xf32>
    %c17_26 = arith.constant 17 : index
    %c0_27 = arith.constant 0 : index
    %29 = vector.load %arg6[%c17_26, %c0_27] : memref<18x32xf32, #tpu.memory_space<vmem>>, vector<1x32xf32>
    tpu.vector_store %arg6[%c17_26, %c0_27], %28 {strides = array<i32>} : memref<18x32xf32, #tpu.memory_space<vmem>>, vector<1x32xf32>,
    %c1_28 = arith.constant 1 : index
    %c0_29 = arith.constant 0 : index
    %30 = vector.load %arg6[%c1_28, %c0_29] : memref<18x32xf32, #tpu.memory_space<vmem>>, vector<16x32xf32>
    tpu.vector_store %arg6[%c1_28, %c0_29], %25 {strides = array<i32>} : memref<18x32xf32, #tpu.memory_space<vmem>>, vector<16x32xf32>,
    %c0_30 = arith.constant 0 : index
    %c0_31 = arith.constant 0 : index
    %31 = vector.load %arg6[%c0_30, %c0_31] : memref<18x32xf32, #tpu.memory_space<vmem>>, vector<16x32xf32>
    %32 = arith.truncf %31 : vector<16x32xf32> to vector<16x32xbf16>
    %c24 = arith.constant 24 : index
    %c0_32 = arith.constant 0 : index
    %33 = vector.load %arg2[%c24, %c0_32] : memref<120x128xbf16, #tpu.memory_space<vmem>>, vector<32x128xbf16>
    %cst_33 = arith.constant dense<0.000000e+00> : vector<16x128xf32>
    %34 = tpu.matmul %32, %33, %cst_33 {dimension_numbers = #tpu.dot_dimension_numbers<[1], [0], [0], [1], [0, 0, 1, 1], [], []>} : vector<16x32xbf16>, vector<32x128xbf16>, vector<16x128xf32> -> vector<16x128xf32>
    %c1_34 = arith.constant 1 : index
    %c0_35 = arith.constant 0 : index
    %35 = vector.load %arg6[%c1_34, %c0_35] : memref<18x32xf32, #tpu.memory_space<vmem>>, vector<16x32xf32>
    %36 = arith.truncf %35 : vector<16x32xf32> to vector<16x32xbf16>
    %c56 = arith.constant 56 : index
    %c0_36 = arith.constant 0 : index
    %37 = vector.load %arg2[%c56, %c0_36] : memref<120x128xbf16, #tpu.memory_space<vmem>>, vector<32x128xbf16>
    %cst_37 = arith.constant dense<0.000000e+00> : vector<16x128xf32>
    %38 = tpu.matmul %36, %37, %cst_37 {dimension_numbers = #tpu.dot_dimension_numbers<[1], [0], [0], [1], [0, 0, 1, 1], [], []>} : vector<16x32xbf16>, vector<32x128xbf16>, vector<16x128xf32> -> vector<16x128xf32>
    %39 = arith.addf %34, %38 : vector<16x128xf32>
    %c2_38 = arith.constant 2 : index
    %c0_39 = arith.constant 0 : index
    %40 = vector.load %arg6[%c2_38, %c0_39] : memref<18x32xf32, #tpu.memory_space<vmem>>, vector<16x32xf32>
    %41 = arith.truncf %40 : vector<16x32xf32> to vector<16x32xbf16>
    %c88 = arith.constant 88 : index
    %c0_40 = arith.constant 0 : index
    %42 = vector.load %arg2[%c88, %c0_40] : memref<120x128xbf16, #tpu.memory_space<vmem>>, vector<32x128xbf16>
    %cst_41 = arith.constant dense<0.000000e+00> : vector<16x128xf32>
    %43 = tpu.matmul %41, %42, %cst_41 {dimension_numbers = #tpu.dot_dimension_numbers<[1], [0], [0], [1], [0, 0, 1, 1], [], []>} : vector<16x32xbf16>, vector<32x128xbf16>, vector<16x128xf32> -> vector<16x128xf32>
    %44 = arith.addf %39, %43 : vector<16x128xf32>
    %c1_42 = arith.constant 1 : index
    %c0_43 = arith.constant 0 : index
    %45 = vector.load %arg3[%c1_42, %c0_43] : memref<2x128xf32, #tpu.memory_space<vmem>>, vector<1x128xf32>
    %46 = vector.broadcast %45 : vector<1x128xf32> to vector<16x128xf32>
    %47 = arith.addf %44, %46 : vector<16x128xf32>
    %cst_44 = arith.constant 0.000000e+00 : f32
    %48 = vector.broadcast %cst_44 : f32 to vector<16x128xf32>
    %49 = arith.maximumf %47, %48 : vector<16x128xf32>
    %c0_45 = arith.constant 0 : index
    %c0_46 = arith.constant 0 : index
    %c0_47 = arith.constant 0 : index
    %50 = vector.load %arg4[%c0_45, %c0_46, %c0_47] : memref<1x16x128xf32, #tpu.memory_space<vmem>>, vector<1x16x128xf32>
    %51 = vector.shape_cast %50 : vector<1x16x128xf32> to vector<16x128xf32>
    %52 = vector.shape_cast %49 : vector<16x128xf32> to vector<1x16x128xf32>
    tpu.vector_store %arg4[%c0_45, %c0_46, %c0_47], %52 {strides = array<i32>} : memref<1x16x128xf32, #tpu.memory_space<vmem>>, vector<1x16x128xf32>,
    return
  }
  func.func @transform_0(%arg0: i32) -> (i32, i32, i32) {
    %c0_i32 = arith.constant 0 : i32
    %c0_i32_0 = arith.constant 0 : i32
    %c0_i32_1 = arith.constant 0 : i32
    return %arg0, %c0_i32, %c0_i32_0 : i32, i32, i32
  }
  func.func @transform_1(%arg0: i32) -> (i32, i32) {
    %c0_i32 = arith.constant 0 : i32
    %c0_i32_0 = arith.constant 0 : i32
    %c0_i32_1 = arith.constant 0 : i32
    return %c0_i32, %c0_i32_0 : i32, i32
  }
  func.func @transform_2(%arg0: i32) -> (i32, i32) {
    %c0_i32 = arith.constant 0 : i32
    %c0_i32_0 = arith.constant 0 : i32
    %c0_i32_1 = arith.constant 0 : i32
    return %c0_i32, %c0_i32_0 : i32, i32
  }
  func.func @transform_3(%arg0: i32) -> (i32, i32, i32) {
    %c0_i32 = arith.constant 0 : i32
    %c0_i32_0 = arith.constant 0 : i32
    %c0_i32_1 = arith.constant 0 : i32
    return %arg0, %c0_i32, %c0_i32_0 : i32, i32, i32
  }
}

</mosaic_0001>

<llo_original>
// kernel: tpu_custom_call.1
$region0: #{tpu_custom_call.1}
  #allocation0 [shape = 'u32[]', space=smem, size = 0x4, offset = 0x4, fixed_abs, tag = 'smem constant byte address 0x4 - core index']
  #allocation1 [shape = 'u32[72,128]{1,0:T(1,128)}', space=vmem, size = 0x9000, scoped, tag = 'internal scratch']
  #allocation2 [shape = 'f32[18,8]{1,0:T(8,128)}', space=vmem, size = 0x3000, scoped, tag = 'scratch operand']
  #allocation3 [shape = 'f32[18,32]{1,0:T(8,128)}', space=vmem, size = 0x3000, scoped, tag = 'scratch operand']
  %s0 = inlined_call_operand.vmem [shape: f32[2,16,8], index: 0, kind: input, shape index: {}]
  %s1 = inlined_call_operand.hbm [shape: bf16[120,128], index: 1, kind: input, shape index: {}]
  %s2 = inlined_call_operand.vmem [shape: f32[2,128], index: 2, kind: input, shape index: {}]
  %s3 = inlined_call_operand.hbm [shape: f32[2,16,128], index: 3, kind: output, shape index: {}]
  %s4 = sld [smem:[#allocation0]]
  $region49: #{tpu_custom_call.1} parent=0
    _
  %s6 = ssub.s32 1, %s4
  %s7 = scalar_select 0, %s6, %s4
  $region1: #{tpu_custom_call.1} parent=0
    #allocation4 [shape = 'u8[30720]{0}', space=vmem, size = 0x7800, scoped, tag = 'input window, operand 1, single buffered']
    #allocation5 [shape = 's32[2]{0}', space=sflag, size = 0x8, scoped, tag = 'scoped memory for tpu_custom_call.1']
    #allocation6 [shape = 's32[2]{0}', space=sflag, size = 0x8, scoped, tag = 'scoped memory for tpu_custom_call.1']
    #allocation7 [shape = 'u8[16384]{0}', space=vmem, size = 0x4000, scoped, tag = 'output window, operand 0']
    %8 = vsyncpa [#allocation5], 0
    %9 = vsyncpa [#allocation6], 0
    %s10 = scalar_lea.sflag [#allocation6], 1
    %11 = vsyncpa %s10, 0
    loop: start=0, step=1, limit=4
    $region2: #{tpu_custom_call.1} parent=1 // loop_pre_header
      _
    $region3: #{tpu_custom_call.1} parent=1 // loop_header
      %s13 = sphi 0, %s17
      %p14 = scmp.ge.s32.totalorder %s13, 4
      %s23 = sphi 0, %s25
      %s26 = sphi 0, %s23
      %s27 = sphi 0, %s26
      %s43 = sphi 0, %s27
      %s47 = sphi 0, %s47
      %s49 = sphi 0, %s47
      %s50 = sphi 0, %s49
      %s64 = sphi 0, %s50
      %s68 = sphi 0, %s68
      %s70 = sphi 0, %s68
      %s71 = sphi 0, %s70
      %s85 = sphi 0, %s71
      %s91 = sphi 0, %s93
      %s94 = sphi 0, %s91
      %s95 = sphi 0, %s94
      %s111 = sphi 0, %s95
    $region4: #{tpu_custom_call.1} parent=1 // loop_header_branch
      %16 = sbr.rel (%p14) target = $region8
    $region5: #{tpu_custom_call.1} parent=1 // loop_body
      %s18 = ssub.s32 %s13, 1
      %s19 = ssub.s32 %s13, 2
      %s20 = sadd.s32 %s13, 1
      %s21 = ssub.s32 %s13, %s20
      %p22 = scmp.eq.s32.totalorder %s21, 0
      %s24 = sadd.s32 %s23, 1
      %s25 = scalar_select %p22, %s23, %s24
      %p28 = pneg %p22
      %p29 = scmp.eq.s32.totalorder %s13, 1
      %p30 = por %p28, %p29
      %p31 = scmp.ne.s32.totalorder %s23, %s26
      %p32 = scmp.eq.s32.totalorder %s13, 0
      %p33 = por %p31, %p32
      %p34 = scmp.ne.s32.totalorder %s23, %s26
      %p35 = scmp.eq.s32.totalorder %s18, 1
      %p36 = por %p34, %p35
      %p37 = scmp.ne.s32.totalorder %s26, %s27
      %p38 = scmp.eq.s32.totalorder %s18, 0
      %p39 = por %p37, %p38
      %p40 = scmp.ne.s32.totalorder %s26, %s27
      %p41 = scmp.eq.s32.totalorder %s19, 1
      %p42 = por %p40, %p41
      %p44 = scmp.ne.s32.totalorder %s27, %s43
      %p45 = scmp.eq.s32.totalorder %s19, 0
      %p46 = por %p44, %p45
      %s48 = sadd.s32 %s47, 1
      %p51 = scmp.eq.s32.totalorder %s13, 1
      %p52 = scmp.ne.s32.totalorder %s47, %s49
      %p53 = scmp.eq.s32.totalorder %s13, 0
      %p54 = por %p52, %p53
      %p55 = scmp.ne.s32.totalorder %s47, %s49
      %p56 = scmp.eq.s32.totalorder %s18, 1
      %p57 = por %p55, %p56
      %p58 = scmp.ne.s32.totalorder %s49, %s50
      %p59 = scmp.eq.s32.totalorder %s18, 0
      %p60 = por %p58, %p59
      %p61 = scmp.ne.s32.totalorder %s49, %s50
      %p62 = scmp.eq.s32.totalorder %s19, 1
      %p63 = por %p61, %p62
      %p65 = scmp.ne.s32.totalorder %s50, %s64
      %p66 = scmp.eq.s32.totalorder %s19, 0
      %p67 = por %p65, %p66
      %s69 = sadd.s32 %s68, 1
      %p72 = scmp.eq.s32.totalorder %s13, 1
      %p73 = scmp.ne.s32.totalorder %s68, %s70
      %p74 = scmp.eq.s32.totalorder %s13, 0
      %p75 = por %p73, %p74
      %p76 = scmp.ne.s32.totalorder %s68, %s70
      %p77 = scmp.eq.s32.totalorder %s18, 1
      %p78 = por %p76, %p77
      %p79 = scmp.ne.s32.totalorder %s70, %s71
      %p80 = scmp.eq.s32.totalorder %s18, 0
      %p81 = por %p79, %p80
      %p82 = scmp.ne.s32.totalorder %s70, %s71
      %p83 = scmp.eq.s32.totalorder %s19, 1
      %p84 = por %p82, %p83
      %p86 = scmp.ne.s32.totalorder %s71, %s85
      %p87 = scmp.eq.s32.totalorder %s19, 0
      %p88 = por %p86, %p87
      %s89 = ssub.s32 %s13, %s20
      %p90 = scmp.eq.s32.totalorder %s89, 0
      %s92 = sadd.s32 %s91, 1
      %s93 = scalar_select %p90, %s91, %s92
      %p96 = pneg %p90
      %p97 = scmp.eq.s32.totalorder %s13, 1
      %p98 = por %p96, %p97
      %p99 = scmp.ne.s32.totalorder %s91, %s94
      %p100 = scmp.eq.s32.totalorder %s13, 0
      %p101 = por %p99, %p100
      %p102 = scmp.ne.s32.totalorder %s91, %s94
      %p103 = scmp.eq.s32.totalorder %s18, 1
      %p104 = por %p102, %p103
      %p105 = scmp.ne.s32.totalorder %s94, %s95
      %p106 = scmp.eq.s32.totalorder %s18, 0
      %p107 = por %p105, %p106
      %p108 = scmp.ne.s32.totalorder %s94, %s95
      %p109 = scmp.eq.s32.totalorder %s19, 1
      %p110 = por %p108, %p109
      %p112 = scmp.ne.s32.totalorder %s95, %s111
      %p113 = scmp.eq.s32.totalorder %s19, 0
      %p114 = por %p112, %p113
      %p115 = scmp.le.s32.totalorder 1, %s13
      %p116 = scmp.lt.s32.totalorder %s13, 3
      %p117 = pnand %p115, %p116
      %p118 = pneg %p117
      // Predicated region
      $region9: #{tpu_custom_call.1} parent=5 // pred_check
        _
      $region10: #{tpu_custom_call.1} parent=5 // pred_check_branch
        %120 = sbr.rel (%p117) target = $region12
      $region11: #{tpu_custom_call.1} parent=5 // pred_region
        %s121 = ssub.s32 %s13, 1
        // Predicated region
        $region13: #{tpu_custom_call.1} parent=11 // pred_check
          %p122 = pneg %p60
        $region14: #{tpu_custom_call.1} parent=11 // pred_check_branch
          %124 = sbr.rel (%p122) target = $region16
        $region15: #{tpu_custom_call.1} parent=11 // pred_region
          %126 = vsyncadd [#allocation5], 0
          %s127 = sshll.u32 %s1, 4
          %s128 = int_to_ptr.hbm [resolvable:$true] %s127
          %s129 = sshll.u32 [#allocation4], 4
          %s130 = int_to_ptr.vmem [resolvable:$true] %s129
          %135 = dma.hbm_to_vmem [thread:$0]  %s128, 960, %s130, [#allocation5], 64, 64, 4
        $region16: #{tpu_custom_call.1} parent=11 // pred_fallthru
          _
        // Predicated region
        $region17: #{tpu_custom_call.1} parent=11 // pred_check
          %p136 = pneg %p81
        $region18: #{tpu_custom_call.1} parent=11 // pred_check_branch
          %138 = sbr.rel (%p136) target = $region20
        $region19: #{tpu_custom_call.1} parent=11 // pred_region
          _
        $region20: #{tpu_custom_call.1} parent=11 // pred_fallthru
          _
      $region12: #{tpu_custom_call.1} parent=5 // pred_fallthru
        _
      %p139 = scmp.lt.s32.totalorder %s13, 2
      // Predicated region
      $region21: #{tpu_custom_call.1} parent=5 // pred_check
        %p140 = pneg %p139
      $region22: #{tpu_custom_call.1} parent=5 // pred_check_branch
        %142 = sbr.rel (%p140) target = $region24
      $region23: #{tpu_custom_call.1} parent=5 // pred_region
        // Predicated region
        $region25: #{tpu_custom_call.1} parent=23 // pred_check
          %p143 = pneg %p33
        $region26: #{tpu_custom_call.1} parent=23 // pred_check_branch
          %145 = sbr.rel (%p143) target = $region28
        $region27: #{tpu_custom_call.1} parent=23 // pred_region
          %p146 = scmp.lt.s32.totalorder %s13, 1
          %s147 = scalar_select %p146, %s13, 1
          %s148 = smul.addr %s147, 2
          %s149 = smul.addr %s148, 8
          %s150 = scalar_lea.vmem %s0, %s149
        $region28: #{tpu_custom_call.1} parent=23 // pred_fallthru
          _
      $region24: #{tpu_custom_call.1} parent=5 // pred_fallthru
        _
      %p151 = scmp.le.s32.totalorder 1, %s13
      %p152 = scmp.lt.s32.totalorder %s13, 3
      %p153 = pnand %p151, %p152
      %p154 = pneg %p153
      // Predicated region
      $region29: #{tpu_custom_call.1} parent=5 // pred_check
        _
      $region30: #{tpu_custom_call.1} parent=5 // pred_check_branch
        %156 = sbr.rel (%p153) target = $region32
      $region31: #{tpu_custom_call.1} parent=5 // pred_region
        %s157 = ssub.s32 %s13, 1
        // Predicated region
        $region33: #{tpu_custom_call.1} parent=31 // pred_check
          %p158 = pneg %p60
        $region34: #{tpu_custom_call.1} parent=31 // pred_check_branch
          %160 = sbr.rel (%p158) target = $region36
        $region35: #{tpu_custom_call.1} parent=31 // pred_region
          %162 = dma.done [#allocation5], 960
        $region36: #{tpu_custom_call.1} parent=31 // pred_fallthru
          _
        %p163 = scmp.lt.s32.totalorder %s18, 1
        %s164 = scalar_select %p163, %s18, 1
        %s165 = smul.addr %s164, 2
        %s166 = smul.addr %s165, 8
        %s167 = scalar_lea.vmem %s0, %s166
        %p168 = pneg %p39
        %p169 = pneg %p36
        %p170 = pneg %p60
        %p171 = pneg %p57
        %p172 = pneg %p81
        %p173 = pneg %p78
        %p174 = pneg %p107
        %p175 = pneg %p104
        %s176 = sand.u32 %s94, 1
        %s177 = scalar_lea.sflag [#allocation6], %s176
        %s178 = sand.u32 %s94, 1
        %s179 = smul.addr %s178, 16
        %s180 = scalar_lea.vmem [#allocation7], %s179
        %p181 = scmp.lt.s32.totalorder %s18, 1
        %s182 = scalar_select %p181, %s18, 1
        %s183 = smul.addr %s182, 2
        %s184 = smul.addr %s183, 8
        %s185 = scalar_lea.vmem %s0, %s184
        %v187 = vld [vmem:[%s185] sm:$0xff]
        %v188 = vld [vmem:[%s185 + $0x8] sm:$0xff]
        %vm189 = vcmask 57344
        %190 = vst.msk [vmem:[#allocation2] sm:$0x1] %vm189, 0.0
        %191 = vst.msk [vmem:[#allocation2 + $0x11] sm:$0x1] %vm189, 0.0
        %vm192 = vcmask 64512
        %193 = vst.msk [vmem:[#allocation2 + $0x1] sm:$0xff] %vm192, %v187
        %194 = vst.msk [vmem:[#allocation2 + $0x9] sm:$0xff] %vm192, %v188
        %v195 = vld [vmem:[#allocation2] sm:$0xff]
        %v196 = vld [vmem:[#allocation2 + $0x8] sm:$0xff]
        %v197 = vpack.c.bf16 %v196, %v195
        %v198 = vld [vmem:[#allocation4] sm:$0xf]
        %v199 = vld [vmem:[#allocation2 + $0x1] sm:$0xff]
        %v200 = vld [vmem:[#allocation2 + $0x9] sm:$0xff]
        %v201 = vpack.c.bf16 %v200, %v199
        %v202 = vld [vmem:[#allocation4 + $0x4] sm:$0xf]
        %v204 = vsel %vm192, %v201, 0
        %vm206 = vcmask 1043456
        %v208 = vsel %vm206, %v202, 0
        %210 = vmatpush.bf16.msra.mxu0 0
        %211 = vmatpush.bf16.msra.mxu0 0
        %212 = vmatpush.bf16.msra.mxu0 0
        %213 = vmatpush.bf16.msra.mxu0 0
        %214 = vmatpush.bf16.msra.mxu0 0
        %215 = vmatpush.bf16.msra.mxu0 0
        %216 = vmatpush.bf16.msra.mxu0 0
        %217 = vmatpush.bf16.msra.mxu0 %v208
        %218 = vmatmul.bf16.gmra.mxu0 %v204
        %v219 = vpop.f32.mrf.mxu0
        %v220 = vadd.f32 0.0, %v219
        %v221 = vpop.f32.mrf.mxu0
        %v222 = vadd.f32 0.0, %v221
        %223 = vdwg.mxu0
        %v225 = vsel %vm192, %v197, 0
        %v228 = vsel %vm206, %v198, 0
        %230 = vmatpush.bf16.msra.mxu0 0
        %231 = vmatpush.bf16.msra.mxu0 0
        %232 = vmatpush.bf16.msra.mxu0 0
        %233 = vmatpush.bf16.msra.mxu0 0
        %234 = vmatpush.bf16.msra.mxu0 0
        %235 = vmatpush.bf16.msra.mxu0 0
        %236 = vmatpush.bf16.msra.mxu0 0
        %237 = vmatpush.bf16.msra.mxu0 %v228
        %238 = vmatmul.bf16.gmra.mxu0 %v225
        %v239 = vpop.f32.mrf.mxu0
        %v240 = vadd.f32 %v220, %v239
        %v241 = vpop.f32.mrf.mxu0
        %v242 = vadd.f32 %v222, %v241
        %243 = vdwg.mxu0
        %v244 = vld [vmem:[#allocation2 + $0x2] sm:$0xff]
        %v245 = vld [vmem:[#allocation2 + $0xa] sm:$0xff]
        %v246 = vpack.c.bf16 %v245, %v244
        %v247 = vld [vmem:[#allocation4 + $0x8] sm:$0xf]
        %v249 = vsel %vm192, %v246, 0
        %v252 = vsel %vm206, %v247, 0
        %254 = vmatpush.bf16.msra.mxu0 0
        %255 = vmatpush.bf16.msra.mxu0 0
        %256 = vmatpush.bf16.msra.mxu0 0
        %257 = vmatpush.bf16.msra.mxu0 0
        %258 = vmatpush.bf16.msra.mxu0 0
        %259 = vmatpush.bf16.msra.mxu0 0
        %260 = vmatpush.bf16.msra.mxu0 0
        %261 = vmatpush.bf16.msra.mxu0 %v252
        %262 = vmatmul.bf16.gmra.mxu0 %v249
        %v263 = vpop.f32.mrf.mxu0
        %v264 = vadd.f32 0.0, %v263
        %v265 = vpop.f32.mrf.mxu0
        %v266 = vadd.f32 0.0, %v265
        %267 = vdwg.mxu0
        %v268 = vadd.f32 %v240, %v264
        %v269 = vadd.f32 %v242, %v266
        %v270 = vld [vmem:[%s2] sm:$0x1]
        %v271 = vperm.slane %v270, 0
        %v272 = vadd.f32 %v268, %v271
        %v273 = vadd.f32 %v269, %v271
        %v274 = vmax.f32 %v272, 0.0
        %v275 = vmax.f32 %v273, 0.0
        %vm276 = vcmask 253952
        %277 = vst.msk [vmem:[#allocation3] sm:$0x1] %vm276, 0.0
        %278 = vst.msk [vmem:[#allocation3 + $0x11] sm:$0x1] %vm276, 0.0
        %vm279 = vcmask 261120
        %280 = vst.msk [vmem:[#allocation3 + $0x1] sm:$0xff] %vm279, %v274
        %281 = vst.msk [vmem:[#allocation3 + $0x9] sm:$0xff] %vm279, %v275
        %v282 = vld [vmem:[#allocation3] sm:$0xff]
        %v283 = vld [vmem:[#allocation3 + $0x8] sm:$0xff]
        %v284 = vpack.c.bf16 %v283, %v282
        %v285 = vld [vmem:[#allocation4 + $0xc] sm:$0xf]
        %v286 = vld [vmem:[#allocation4 + $0x10] sm:$0xf]
        %v287 = vld [vmem:[#allocation4 + $0x14] sm:$0xf]
        %v288 = vld [vmem:[#allocation4 + $0x18] sm:$0xf]
        %v289 = vld [vmem:[#allocation3 + $0x1] sm:$0xff]
        %v290 = vld [vmem:[#allocation3 + $0x9] sm:$0xff]
        %v291 = vpack.c.bf16 %v290, %v289
        %v292 = vld [vmem:[#allocation4 + $0x1c] sm:$0xf]
        %v293 = vld [vmem:[#allocation4 + $0x20] sm:$0xf]
        %v294 = vld [vmem:[#allocation4 + $0x24] sm:$0xf]
        %v295 = vld [vmem:[#allocation4 + $0x28] sm:$0xf]
        %v300 = vunpack.c.l.b16 %v292
        %v301 = vunpack.c.l.b16 %v293
        %v302 = vunpack.c.l.b16 %v294
        %v303 = vunpack.c.l.b16 %v295
        %v304 = vpack.c.b16 %v301, %v300
        %v305 = vpack.c.b16 %v303, %v302
        %v309 = vsel %vm279, %v291, 0
        %311 = vmatpush.bf16.msra.mxu0 0
        %312 = vmatpush.bf16.msra.mxu0 0
        %313 = vmatpush.bf16.msra.mxu0 0
        %314 = vmatpush.bf16.msra.mxu0 0
        %315 = vmatpush.bf16.msra.mxu0 0
        %316 = vmatpush.bf16.msra.mxu0 0
        %317 = vmatpush.bf16.msra.mxu0 %v305
        %318 = vmatpush.bf16.msra.mxu0 %v304
        %319 = vmatmul.bf16.gmra.mxu0 %v309
        %v320 = vpop.f32.mrf.mxu0
        %v321 = vadd.f32 0.0, %v320
        %v322 = vpop.f32.mrf.mxu0
        %v323 = vadd.f32 0.0, %v322
        %324 = vdwg.mxu0
        %v329 = vunpack.c.l.b16 %v285
        %v330 = vunpack.c.l.b16 %v286
        %v331 = vunpack.c.l.b16 %v287
        %v332 = vunpack.c.l.b16 %v288
        %v333 = vpack.c.b16 %v330, %v329
        %v334 = vpack.c.b16 %v332, %v331
        %v338 = vsel %vm279, %v284, 0
        %340 = vmatpush.bf16.msra.mxu0 0
        %341 = vmatpush.bf16.msra.mxu0 0
        %342 = vmatpush.bf16.msra.mxu0 0
        %343 = vmatpush.bf16.msra.mxu0 0
        %344 = vmatpush.bf16.msra.mxu0 0
        %345 = vmatpush.bf16.msra.mxu0 0
        %346 = vmatpush.bf16.msra.mxu0 %v334
        %347 = vmatpush.bf16.msra.mxu0 %v333
        %348 = vmatmul.bf16.gmra.mxu0 %v338
        %v349 = vpop.f32.mrf.mxu0
        %v350 = vadd.f32 %v321, %v349
        %v351 = vpop.f32.mrf.mxu0
        %v352 = vadd.f32 %v323, %v351
        %353 = vdwg.mxu0
        %v354 = vld [vmem:[#allocation3 + $0x2] sm:$0xff]
        %v355 = vld [vmem:[#allocation3 + $0xa] sm:$0xff]
        %v356 = vpack.c.bf16 %v355, %v354
        %v357 = vld [vmem:[#allocation4 + $0x2c] sm:$0xf]
        %v358 = vld [vmem:[#allocation4 + $0x30] sm:$0xf]
        %v359 = vld [vmem:[#allocation4 + $0x34] sm:$0xf]
        %v360 = vld [vmem:[#allocation4 + $0x38] sm:$0xf]
        %v365 = vunpack.c.l.b16 %v357
        %v366 = vunpack.c.l.b16 %v358
        %v367 = vunpack.c.l.b16 %v359
        %v368 = vunpack.c.l.b16 %v360
        %v369 = vpack.c.b16 %v366, %v365
        %v370 = vpack.c.b16 %v368, %v367
        %v374 = vsel %vm279, %v356, 0
        %376 = vmatpush.bf16.msra.mxu0 0
        %377 = vmatpush.bf16.msra.mxu0 0
        %378 = vmatpush.bf16.msra.mxu0 0
        %379 = vmatpush.bf16.msra.mxu0 0
        %380 = vmatpush.bf16.msra.mxu0 0
        %381 = vmatpush.bf16.msra.mxu0 0
        %382 = vmatpush.bf16.msra.mxu0 %v370
        %383 = vmatpush.bf16.msra.mxu0 %v369
        %384 = vmatmul.bf16.gmra.mxu0 %v374
        %v385 = vpop.f32.mrf.mxu0
        %v386 = vadd.f32 0.0, %v385
        %v387 = vpop.f32.mrf.mxu0
        %v388 = vadd.f32 0.0, %v387
        %389 = vdwg.mxu0
        %v390 = vadd.f32 %v350, %v386
        %v391 = vadd.f32 %v352, %v388
        %v392 = vld [vmem:[%s2 + $0x1] sm:$0x1]
        %v393 = vperm.slane %v392, 0
        %v394 = vadd.f32 %v390, %v393
        %v395 = vadd.f32 %v391, %v393
        %v396 = vmax.f32 %v394, 0.0
        %v397 = vmax.f32 %v395, 0.0
        %398 = vst [vmem:[%s180] sm:$0xff] %v396
        %399 = vst [vmem:[%s180 + $0x8] sm:$0xff] %v397
        %s400 = sand.u32 %s94, 1
        %s401 = scalar_lea.sflag [#allocation6], %s400
        %s402 = sand.u32 %s94, 1
        %s403 = smul.addr %s402, 16
        %s404 = scalar_lea.vmem [#allocation7], %s403
        // Predicated region
        $region37: #{tpu_custom_call.1} parent=31 // pred_check
          %p405 = pneg %p104
        $region38: #{tpu_custom_call.1} parent=31 // pred_check_branch
          %407 = sbr.rel (%p405) target = $region40
        $region39: #{tpu_custom_call.1} parent=31 // pred_region
          %409 = vsyncadd %s401, 0
          %s410 = smul.addr %s18, 2
          %s411 = smul.addr %s410, 8
          %s412 = scalar_lea.hbm %s3, %s411
          %s413 = sshll.u32 %s404, 4
          %s414 = int_to_ptr.vmem [resolvable:$true] %s413
          %s415 = sshll.u32 %s412, 4
          %s416 = int_to_ptr.hbm [resolvable:$true] %s415
          %421 = dma.vmem_to_hbm [thread:$0]  %s414, 256, %s416, %s401, 128, 128, 8
        $region40: #{tpu_custom_call.1} parent=31 // pred_fallthru
          _
      $region32: #{tpu_custom_call.1} parent=5 // pred_fallthru
        _
      %p422 = scmp.le.s32.totalorder 2, %s13
      // Predicated region
      $region41: #{tpu_custom_call.1} parent=5 // pred_check
        %p423 = pneg %p422
      $region42: #{tpu_custom_call.1} parent=5 // pred_check_branch
        %425 = sbr.rel (%p423) target = $region44
      $region43: #{tpu_custom_call.1} parent=5 // pred_region
        %s426 = ssub.s32 %s13, 2
        // Predicated region
        $region45: #{tpu_custom_call.1} parent=43 // pred_check
          %p427 = pneg %p110
        $region46: #{tpu_custom_call.1} parent=43 // pred_check_branch
          %429 = sbr.rel (%p427) target = $region48
        $region47: #{tpu_custom_call.1} parent=43 // pred_region
          %s430 = sand.u32 %s95, 1
          %s431 = scalar_lea.sflag [#allocation6], %s430
          %s432 = sand.u32 %s95, 1
          %s433 = smul.addr %s432, 16
          %s434 = scalar_lea.vmem [#allocation7], %s433
          %436 = dma.done %s431, 256
        $region48: #{tpu_custom_call.1} parent=43 // pred_fallthru
          _
      $region44: #{tpu_custom_call.1} parent=5 // pred_fallthru
        _
    $region6: #{tpu_custom_call.1} parent=1 // loop_footer
      %s17 = sadd.s32 1, %s13
    $region7: #{tpu_custom_call.1} parent=1 // loop_footer_branch
      %12 = sbr.rel target = $region3
    $region8: #{tpu_custom_call.1} parent=1 // loop_exit
      _
    %437 = vsyncpa [#allocation5], 1
    %s438 = scalar_lea.sflag [#allocation5], 1
    %439 = vsyncpa %s438, 1
    %440 = vsyncpa [#allocation6], 1
    %s441 = scalar_lea.sflag [#allocation6], 1
    %442 = vsyncpa %s441, 1

</llo_original>
